<compile_context>
chip_gen: v6e
topology: v6e:2x2x1
jax: 0.10.0
libtpu: 0.0.40
codegen_flags: <defaults>
</compile_context>

<pallas_src>
import functools

import jax
import jax.numpy as jnp
from jax import lax
from jax.experimental import pallas as pl
from jax.experimental.pallas import tpu as pltpu

BN_EPS = 1e-5                 # torch.nn.BatchNorm2d default
LANE_TARGET = 1024            # aim for 512-2048 lanes per grid step
TAPS = tuple((oh, ow) for oh in (-1, 0, 1) for ow in (-1, 0, 1))  # t = 3*dh+dw


def _round_up(v, m):
    return (v + m - 1) // m * m


def double_conv_kernel(x_ref, m_ref, w1_ref, b1_ref, w2_ref, b2_ref,
                       out_ref, stack_ref, *, W, c_in_p, c_mid_p, c_max_p):
    """One grid step = full DoubleConv forward for K whole images.

    x_ref    : (C_in_p,  LANES) f32  K images; channels on sublanes,
                                     per-image flattened spatial on lanes
    m_ref    : (9*c_max_p, LANES) f32 per-tap "same"-padding masks,
                                     pre-broadcast to channel sublanes
    w1_ref   : (C_mid_p, 9*C_in_p)   conv1 weights, tap-major, BN pre-folded
    b1_ref   : (C_mid_p, 1)          conv1 bias, BN pre-folded
    w2_ref   : (C_out_p, 9*C_mid_p)  conv2 weights, tap-major
    b2_ref   : (C_out_p, 1)          conv2 bias
    out_ref  : (C_out_p, LANES)
    stack_ref: (9*c_max_p, LANES) f32 VMEM scratch holding the im2col stack
    """
    lanes = x_ref.shape[-1]

    def conv3x3(x, c_p, w_mat, bias):
        # Write the 9 shifted + masked taps straight into the VMEM stack
        # scratch (no concatenate copy), then a single MXU dot.
        for t, (oh, ow) in enumerate(TAPS):
            s = oh * W + ow                              # flat tap offset
            xs = x if s == 0 else pltpu.roll(x, (-s) % lanes, axis=1)
            if oh == 0 and ow == 0:
                # Center tap: mask is all ones -> skip the multiply.
                stack_ref[t * c_p:(t + 1) * c_p, :] = xs
            else:
                m = m_ref[t * c_max_p:t * c_max_p + c_p, :]
                stack_ref[t * c_p:(t + 1) * c_p, :] = xs * m
        stack = stack_ref[0:9 * c_p, :]
        return jnp.dot(w_mat, stack, preferred_element_type=jnp.float32) + bias

    x = x_ref[...]
    h = conv3x3(x, c_in_p, w1_ref[...], b1_ref[...])     # conv1 (+ folded BN)
    y = conv3x3(h, c_mid_p, w2_ref[...], b2_ref[...])    # conv2
    out_ref[...] = jnp.maximum(y, 0.0).astype(out_ref.dtype)   # ReLU


def _prepare_params(params, c_in, *, eps=BN_EPS):
    """Fold eval-mode BN into conv1; build tap-major, sublane-padded weight
    matrices and bias columns (host-side, once per layer)."""
    w1, b1, gamma, beta, rmean, rvar, w2, b2 = params
    c_mid, c_out = w1.shape[0], w2.shape[0]
    c_in_p, c_mid_p, c_out_p = (_round_up(c, 8) for c in (c_in, c_mid, c_out))

    scale = gamma / jnp.sqrt(rvar + eps)
    w1f = w1 * scale[:, None, None, None]
    b1f = (b1 - rmean) * scale + beta

    w1p = jnp.zeros((c_mid_p, c_in_p, 3, 3), jnp.float32).at[:c_mid, :c_in].set(w1f)
    b1p = jnp.zeros((c_mid_p,), jnp.float32).at[:c_mid].set(b1f)
    w2p = jnp.zeros((c_out_p, c_mid_p, 3, 3), jnp.float32).at[:c_out, :c_mid].set(w2)
    b2p = jnp.zeros((c_out_p,), jnp.float32).at[:c_out].set(b2)

    # Tap-major (tap t = 3*dh + dw), one block of C_in rows per tap — this
    # matches the in-kernel stack layout exactly.
    w1m = jnp.transpose(w1p, (0, 2, 3, 1)).reshape(c_mid_p, 9 * c_in_p)
    w2m = jnp.transpose(w2p, (0, 2, 3, 1)).reshape(c_out_p, 9 * c_mid_p)
    return (w1m, b1p.reshape(c_mid_p, 1), w2m, b2p.reshape(c_out_p, 1),
            c_in_p, c_mid_p, c_out_p)


def _tap_masks(H, W, HW_pad, lanes, c_rows):
    """(9*c_rows, lanes) f32 "same"-padding masks.

    Computed from (lane % HW_pad) so multi-image lane blocks never leak
    pixels across image boundaries, and pre-broadcast to `c_rows` sublanes so
    the per-tap multiply in the kernel is a plain full-vreg vmul.
    """
    pos = jnp.arange(lanes, dtype=jnp.int32) % HW_pad    # per-image pixel idx
    row, col = pos // W, pos % W
    ms = []
    for oh, ow in TAPS:
        ok = ((row + oh >= 0) & (row + oh < H) &
              (col + ow >= 0) & (col + ow < W) & (pos < H * W))
        ms.append(ok)
    m = jnp.stack(ms).astype(jnp.float32)                # (9, lanes)
    m = jnp.broadcast_to(m[:, None, :], (9, c_rows, lanes))
    return m.reshape(9 * c_rows, lanes)


def double_conv_lane_layout(x2, masks, w1m, b1m, w2m, b2m, *,
                            W, HW_pad, K, c_in_p, c_mid_p, c_out_p):
    """Core pallas_call on lane-dense activations.

    x2: (C_in_p, N_pad*HW_pad) -> (C_out_p, N_pad*HW_pad).  Keeping stacked
    layers in this layout avoids the HBM-bound NCHW <-> (C, N*HW) transposes
    between DoubleConv / pool calls.
    """
    c_max_p = max(c_in_p, c_mid_p)
    lanes = K * HW_pad
    total = x2.shape[1]
    n_steps = total // lanes

    flops = 2 * total * 9 * (c_in_p * c_mid_p + c_mid_p * c_out_p)
    bytes_accessed = 4 * (x2.size + c_out_p * total + masks.size
                          + w1m.size + w2m.size + b1m.size + b2m.size)

    kern = functools.partial(double_conv_kernel, W=W, c_in_p=c_in_p,
                             c_mid_p=c_mid_p, c_max_p=c_max_p)

    return pl.pallas_call(
        kern,
        out_shape=jax.ShapeDtypeStruct((c_out_p, total), jnp.float32),
        grid=(n_steps,),
        in_specs=[
            pl.BlockSpec((c_in_p, lanes), lambda n: (0, n)),         # K images
            pl.BlockSpec((9 * c_max_p, lanes), lambda n: (0, 0)),    # masks (grid-invariant)
            pl.BlockSpec((c_mid_p, 9 * c_in_p), lambda n: (0, 0)),   # conv1 W (BN folded)
            pl.BlockSpec((c_mid_p, 1), lambda n: (0, 0)),            # conv1 b (BN folded)
            pl.BlockSpec((c_out_p, 9 * c_mid_p), lambda n: (0, 0)),  # conv2 W
            pl.BlockSpec((c_out_p, 1), lambda n: (0, 0)),            # conv2 b
        ],
        out_specs=pl.BlockSpec((c_out_p, lanes), lambda n: (0, n)),
        scratch_shapes=[pltpu.VMEM((9 * c_max_p, lanes), jnp.float32)],
        compiler_params=pltpu.CompilerParams(
            dimension_semantics=("parallel",),
            vmem_limit_bytes=32 * 1024 * 1024),
        cost_estimate=pl.CostEstimate(flops=flops, transcendentals=0,
                                      bytes_accessed=bytes_accessed),
    )(x2, masks, w1m, b1m, w2m, b2m)


def double_conv_forward(x, params, *, eps=BN_EPS, lane_target=LANE_TARGET):
    """x: (N, C_in, H, W) f32 -> (N, C_out, H, W) f32 (eval-mode BatchNorm)."""
    N, C_in, H, W = x.shape
    C_out = params[6].shape[0]
    HW = H * W
    HW_pad = _round_up(HW, 128)            # lane-pad flattened spatial axis

    (w1m, b1m, w2m, b2m, c_in_p, c_mid_p, c_out_p) = _prepare_params(
        params, C_in, eps=eps)
    c_max_p = max(c_in_p, c_mid_p)

    # K whole images per grid step: amortizes the ~0.35us/step overhead and
    # widens the MXU N-dim.  (On v7x, keeping >=2 grid steps also keeps both
    # TensorCores busy; at N*HW below ~1024 lanes the wider block wins.)
    K = max(1, min(N, lane_target // HW_pad))
    N_pad = _round_up(N, K)
    lanes = K * HW_pad

    # NCHW -> lane-dense (C_in_p, N_pad*HW_pad): channels on sublanes,
    # per-image lane-padded flattened spatial on lanes.
    x2 = jnp.zeros((c_in_p, N_pad, HW_pad), jnp.float32)
    x2 = x2.at[:C_in, :N, :HW].set(
        jnp.transpose(x, (1, 0, 2, 3)).reshape(C_in, N, HW))
    x2 = x2.reshape(c_in_p, N_pad * HW_pad)

    masks = _tap_masks(H, W, HW_pad, lanes, c_max_p)

    out = double_conv_lane_layout(x2, masks, w1m, b1m, w2m, b2m,
                                  W=W, HW_pad=HW_pad, K=K,
                                  c_in_p=c_in_p, c_mid_p=c_mid_p,
                                  c_out_p=c_out_p)

    out = out.reshape(c_out_p, N_pad, HW_pad)[:C_out, :N, :HW]
    return jnp.transpose(out.reshape(C_out, N, H, W), (1, 0, 2, 3))


def init_params(key, c_in=4, c_out=8):
    """Deterministic DoubleConv parameters (PyTorch-style shapes)."""
    ks = jax.random.split(key, 8)
    w1 = 0.2 * jax.random.normal(ks[0], (c_out, c_in, 3, 3), jnp.float32)
    b1 = 0.1 * jax.random.normal(ks[1], (c_out,), jnp.float32)
    gamma = 1.0 + 0.1 * jax.random.normal(ks[2], (c_out,), jnp.float32)  # BN weight
    beta = 0.1 * jax.random.normal(ks[3], (c_out,), jnp.float32)         # BN bias
    rmean = 0.1 * jax.random.normal(ks[4], (c_out,), jnp.float32)        # BN running_mean
    rvar = 0.5 + jax.random.uniform(ks[5], (c_out,), jnp.float32)        # BN running_var
    w2 = 0.2 * jax.random.normal(ks[6], (c_out, c_out, 3, 3), jnp.float32)
    b2 = 0.1 * jax.random.normal(ks[7], (c_out,), jnp.float32)
    return (w1, b1, gamma, beta, rmean, rvar, w2, b2)


def double_conv_reference(x, params, *, eps=BN_EPS):
    """Pure-JAX reference mirroring the PyTorch forward (eval-mode BatchNorm)."""
    w1, b1, gamma, beta, rmean, rvar, w2, b2 = params

    def conv3x3(xin, w, b):
        N, C, H, W = xin.shape
        xp = jnp.pad(xin, ((0, 0), (0, 0), (1, 1), (1, 1)))
        out = jnp.zeros((N, w.shape[0], H, W), jnp.float32) + b[None, :, None, None]
        for dh in range(3):
            for dw in range(3):
                patch = xp[:, :, dh:dh + H, dw:dw + W]
                out = out + jnp.einsum("oi,nihw->nohw", w[:, :, dh, dw], patch,
                                       precision=lax.Precision.HIGHEST)
        return out

    y = conv3x3(x, w1, b1)
    y = (y - rmean[None, :, None, None]) / jnp.sqrt(rvar[None, :, None, None] + eps)
    y = gamma[None, :, None, None] * y + beta[None, :, None, None]
    y = conv3x3(y, w2, b2)
    return jnp.maximum(y, 0.0)


if __name__ == "__main__":
    key = jax.random.PRNGKey(0)
    kx, kp = jax.random.split(key)
    N, C_IN, C_OUT, H, W = 2, 4, 8, 16, 16
    x = jax.random.normal(kx, (N, C_IN, H, W), jnp.float32)
    params = init_params(kp, c_in=C_IN, c_out=C_OUT)

    out = double_conv_forward(x, params)
    out = jax.block_until_ready(out)

    ref = double_conv_reference(x, params)
    assert out.shape == ref.shape == (N, C_OUT, H, W)
    err = float(jnp.max(jnp.abs(out - ref)))
    assert jnp.allclose(out, ref, rtol=1e-3, atol=1e-3), f"max abs err {err}"
    print("KERNEL_OK")
</pallas_src>

<mosaic_0001>
module attributes {stable_mosaic.version = 11 : i64} {
  func.func @double_conv_kernel(%arg0: i32, %arg1: memref<8x512xf32, #tpu.memory_space<vmem>>, %arg2: memref<72x512xf32, #tpu.memory_space<vmem>>, %arg3: memref<8x72xf32, #tpu.memory_space<vmem>>, %arg4: memref<8x1xf32, #tpu.memory_space<vmem>>, %arg5: memref<8x72xf32, #tpu.memory_space<vmem>>, %arg6: memref<8x1xf32, #tpu.memory_space<vmem>>, %arg7: memref<8x512xf32, #tpu.memory_space<vmem>>, %arg8: memref<72x512xf32, #tpu.memory_space<vmem>>) attributes {dimension_semantics = [#tpu.dimension_semantics<parallel>], iteration_bounds = array<i64: 1>, scalar_prefetch = 0 : i64, scratch_operands = 1 : i64, tpu.core_type = #tpu.core_type<tc>, window_params = [{transform_indices = @transform_0, window_bounds = array<i64: 8, 512>}, {pipeline_mode = #tpu.pipeline_mode<synchronous>, transform_indices = @transform_1, window_bounds = array<i64: 72, 512>}, {pipeline_mode = #tpu.pipeline_mode<synchronous>, transform_indices = @transform_2, window_bounds = array<i64: 8, 72>}, {pipeline_mode = #tpu.pipeline_mode<synchronous>, transform_indices = @transform_3, window_bounds = array<i64: 8, 1>}, {pipeline_mode = #tpu.pipeline_mode<synchronous>, transform_indices = @transform_4, window_bounds = array<i64: 8, 72>}, {pipeline_mode = #tpu.pipeline_mode<synchronous>, transform_indices = @transform_5, window_bounds = array<i64: 8, 1>}, {transform_indices = @transform_6, window_bounds = array<i64: 8, 512>}]} {
    %c0 = arith.constant 0 : index
    %c0_0 = arith.constant 0 : index
    %0 = vector.load %arg1[%c0, %c0_0] : memref<8x512xf32, #tpu.memory_space<vmem>>, vector<8x512xf32>
    %c0_1 = arith.constant 0 : index
    %c0_2 = arith.constant 0 : index
    %1 = vector.load %arg3[%c0_1, %c0_2] : memref<8x72xf32, #tpu.memory_space<vmem>>, vector<8x72xf32>
    %c0_3 = arith.constant 0 : index
    %c0_4 = arith.constant 0 : index
    %2 = vector.load %arg4[%c0_3, %c0_4] : memref<8x1xf32, #tpu.memory_space<vmem>>, vector<8x1xf32>
    %c17_i32 = arith.constant 17 : i32
    %3 = tpu.dynamic_rotate %0 by %c17_i32 dim 1 : vector<8x512xf32>, i32 -> vector<8x512xf32>
    %c0_5 = arith.constant 0 : index
    %c0_6 = arith.constant 0 : index
    %4 = vector.load %arg2[%c0_5, %c0_6] : memref<72x512xf32, #tpu.memory_space<vmem>>, vector<8x512xf32>
    %5 = arith.mulf %3, %4 : vector<8x512xf32>
    %c0_7 = arith.constant 0 : index
    %c0_8 = arith.constant 0 : index
    %6 = vector.load %arg8[%c0_7, %c0_8] : memref<72x512xf32, #tpu.memory_space<vmem>>, vector<8x512xf32>
    tpu.vector_store %arg8[%c0_7, %c0_8], %5 {strides = array<i32>} : memref<72x512xf32, #tpu.memory_space<vmem>>, vector<8x512xf32>,
    %c16_i32 = arith.constant 16 : i32
    %7 = tpu.dynamic_rotate %0 by %c16_i32 dim 1 : vector<8x512xf32>, i32 -> vector<8x512xf32>
    %c8 = arith.constant 8 : index
    %c0_9 = arith.constant 0 : index
    %8 = vector.load %arg2[%c8, %c0_9] : memref<72x512xf32, #tpu.memory_space<vmem>>, vector<8x512xf32>
    %9 = arith.mulf %7, %8 : vector<8x512xf32>
    %c8_10 = arith.constant 8 : index
    %c0_11 = arith.constant 0 : index
    %10 = vector.load %arg8[%c8_10, %c0_11] : memref<72x512xf32, #tpu.memory_space<vmem>>, vector<8x512xf32>
    tpu.vector_store %arg8[%c8_10, %c0_11], %9 {strides = array<i32>} : memref<72x512xf32, #tpu.memory_space<vmem>>, vector<8x512xf32>,
    %c15_i32 = arith.constant 15 : i32
    %11 = tpu.dynamic_rotate %0 by %c15_i32 dim 1 : vector<8x512xf32>, i32 -> vector<8x512xf32>
    %c16 = arith.constant 16 : index
    %c0_12 = arith.constant 0 : index
    %12 = vector.load %arg2[%c16, %c0_12] : memref<72x512xf32, #tpu.memory_space<vmem>>, vector<8x512xf32>
    %13 = arith.mulf %11, %12 : vector<8x512xf32>
    %c16_13 = arith.constant 16 : index
    %c0_14 = arith.constant 0 : index
    %14 = vector.load %arg8[%c16_13, %c0_14] : memref<72x512xf32, #tpu.memory_space<vmem>>, vector<8x512xf32>
    tpu.vector_store %arg8[%c16_13, %c0_14], %13 {strides = array<i32>} : memref<72x512xf32, #tpu.memory_space<vmem>>, vector<8x512xf32>,
    %c1_i32 = arith.constant 1 : i32
    %15 = tpu.dynamic_rotate %0 by %c1_i32 dim 1 : vector<8x512xf32>, i32 -> vector<8x512xf32>
    %c24 = arith.constant 24 : index
    %c0_15 = arith.constant 0 : index
    %16 = vector.load %arg2[%c24, %c0_15] : memref<72x512xf32, #tpu.memory_space<vmem>>, vector<8x512xf32>
    %17 = arith.mulf %15, %16 : vector<8x512xf32>
    %c24_16 = arith.constant 24 : index
    %c0_17 = arith.constant 0 : index
    %18 = vector.load %arg8[%c24_16, %c0_17] : memref<72x512xf32, #tpu.memory_space<vmem>>, vector<8x512xf32>
    tpu.vector_store %arg8[%c24_16, %c0_17], %17 {strides = array<i32>} : memref<72x512xf32, #tpu.memory_space<vmem>>, vector<8x512xf32>,
    %c32 = arith.constant 32 : index
    %c0_18 = arith.constant 0 : index
    %19 = vector.load %arg8[%c32, %c0_18] : memref<72x512xf32, #tpu.memory_space<vmem>>, vector<8x512xf32>
    tpu.vector_store %arg8[%c32, %c0_18], %0 {strides = array<i32>} : memref<72x512xf32, #tpu.memory_space<vmem>>, vector<8x512xf32>,
    %c511_i32 = arith.constant 511 : i32
    %20 = tpu.dynamic_rotate %0 by %c511_i32 dim 1 : vector<8x512xf32>, i32 -> vector<8x512xf32>
    %c40 = arith.constant 40 : index
    %c0_19 = arith.constant 0 : index
    %21 = vector.load %arg2[%c40, %c0_19] : memref<72x512xf32, #tpu.memory_space<vmem>>, vector<8x512xf32>
    %22 = arith.mulf %20, %21 : vector<8x512xf32>
    %c40_20 = arith.constant 40 : index
    %c0_21 = arith.constant 0 : index
    %23 = vector.load %arg8[%c40_20, %c0_21] : memref<72x512xf32, #tpu.memory_space<vmem>>, vector<8x512xf32>
    tpu.vector_store %arg8[%c40_20, %c0_21], %22 {strides = array<i32>} : memref<72x512xf32, #tpu.memory_space<vmem>>, vector<8x512xf32>,
    %c497_i32 = arith.constant 497 : i32
    %24 = tpu.dynamic_rotate %0 by %c497_i32 dim 1 : vector<8x512xf32>, i32 -> vector<8x512xf32>
    %c48 = arith.constant 48 : index
    %c0_22 = arith.constant 0 : index
    %25 = vector.load %arg2[%c48, %c0_22] : memref<72x512xf32, #tpu.memory_space<vmem>>, vector<8x512xf32>
    %26 = arith.mulf %24, %25 : vector<8x512xf32>
    %c48_23 = arith.constant 48 : index
    %c0_24 = arith.constant 0 : index
    %27 = vector.load %arg8[%c48_23, %c0_24] : memref<72x512xf32, #tpu.memory_space<vmem>>, vector<8x512xf32>
    tpu.vector_store %arg8[%c48_23, %c0_24], %26 {strides = array<i32>} : memref<72x512xf32, #tpu.memory_space<vmem>>, vector<8x512xf32>,
    %c496_i32 = arith.constant 496 : i32
    %28 = tpu.dynamic_rotate %0 by %c496_i32 dim 1 : vector<8x512xf32>, i32 -> vector<8x512xf32>
    %c56 = arith.constant 56 : index
    %c0_25 = arith.constant 0 : index
    %29 = vector.load %arg2[%c56, %c0_25] : memref<72x512xf32, #tpu.memory_space<vmem>>, vector<8x512xf32>
    %30 = arith.mulf %28, %29 : vector<8x512xf32>
    %c56_26 = arith.constant 56 : index
    %c0_27 = arith.constant 0 : index
    %31 = vector.load %arg8[%c56_26, %c0_27] : memref<72x512xf32, #tpu.memory_space<vmem>>, vector<8x512xf32>
    tpu.vector_store %arg8[%c56_26, %c0_27], %30 {strides = array<i32>} : memref<72x512xf32, #tpu.memory_space<vmem>>, vector<8x512xf32>,
    %c495_i32 = arith.constant 495 : i32
    %32 = tpu.dynamic_rotate %0 by %c495_i32 dim 1 : vector<8x512xf32>, i32 -> vector<8x512xf32>
    %c64 = arith.constant 64 : index
    %c0_28 = arith.constant 0 : index
    %33 = vector.load %arg2[%c64, %c0_28] : memref<72x512xf32, #tpu.memory_space<vmem>>, vector<8x512xf32>
    %34 = arith.mulf %32, %33 : vector<8x512xf32>
    %c64_29 = arith.constant 64 : index
    %c0_30 = arith.constant 0 : index
    %35 = vector.load %arg8[%c64_29, %c0_30] : memref<72x512xf32, #tpu.memory_space<vmem>>, vector<8x512xf32>
    tpu.vector_store %arg8[%c64_29, %c0_30], %34 {strides = array<i32>} : memref<72x512xf32, #tpu.memory_space<vmem>>, vector<8x512xf32>,
    %c0_31 = arith.constant 0 : index
    %c0_32 = arith.constant 0 : index
    %36 = vector.load %arg8[%c0_31, %c0_32] : memref<72x512xf32, #tpu.memory_space<vmem>>, vector<72x512xf32>
    %cst = arith.constant dense<0.000000e+00> : vector<8x512xf32>
    %37 = tpu.matmul %1, %36, %cst {dimension_numbers = #tpu.dot_dimension_numbers<[1], [0], [0], [1], [0, 0, 1, 1], [], []>} : vector<8x72xf32>, vector<72x512xf32>, vector<8x512xf32> -> vector<8x512xf32>
    %38 = vector.broadcast %2 : vector<8x1xf32> to vector<8x512xf32>
    %39 = arith.addf %37, %38 : vector<8x512xf32>
    %c0_33 = arith.constant 0 : index
    %c0_34 = arith.constant 0 : index
    %40 = vector.load %arg5[%c0_33, %c0_34] : memref<8x72xf32, #tpu.memory_space<vmem>>, vector<8x72xf32>
    %c0_35 = arith.constant 0 : index
    %c0_36 = arith.constant 0 : index
    %41 = vector.load %arg6[%c0_35, %c0_36] : memref<8x1xf32, #tpu.memory_space<vmem>>, vector<8x1xf32>
    %c17_i32_37 = arith.constant 17 : i32
    %42 = tpu.dynamic_rotate %39 by %c17_i32_37 dim 1 : vector<8x512xf32>, i32 -> vector<8x512xf32>
    %c0_38 = arith.constant 0 : index
    %c0_39 = arith.constant 0 : index
    %43 = vector.load %arg2[%c0_38, %c0_39] : memref<72x512xf32, #tpu.memory_space<vmem>>, vector<8x512xf32>
    %44 = arith.mulf %42, %43 : vector<8x512xf32>
    %c0_40 = arith.constant 0 : index
    %c0_41 = arith.constant 0 : index
    %45 = vector.load %arg8[%c0_40, %c0_41] : memref<72x512xf32, #tpu.memory_space<vmem>>, vector<8x512xf32>
    tpu.vector_store %arg8[%c0_40, %c0_41], %44 {strides = array<i32>} : memref<72x512xf32, #tpu.memory_space<vmem>>, vector<8x512xf32>,
    %c16_i32_42 = arith.constant 16 : i32
    %46 = tpu.dynamic_rotate %39 by %c16_i32_42 dim 1 : vector<8x512xf32>, i32 -> vector<8x512xf32>
    %c8_43 = arith.constant 8 : index
    %c0_44 = arith.constant 0 : index
    %47 = vector.load %arg2[%c8_43, %c0_44] : memref<72x512xf32, #tpu.memory_space<vmem>>, vector<8x512xf32>
    %48 = arith.mulf %46, %47 : vector<8x512xf32>
    %c8_45 = arith.constant 8 : index
    %c0_46 = arith.constant 0 : index
    %49 = vector.load %arg8[%c8_45, %c0_46] : memref<72x512xf32, #tpu.memory_space<vmem>>, vector<8x512xf32>
    tpu.vector_store %arg8[%c8_45, %c0_46], %48 {strides = array<i32>} : memref<72x512xf32, #tpu.memory_space<vmem>>, vector<8x512xf32>,
    %c15_i32_47 = arith.constant 15 : i32
    %50 = tpu.dynamic_rotate %39 by %c15_i32_47 dim 1 : vector<8x512xf32>, i32 -> vector<8x512xf32>
    %c16_48 = arith.constant 16 : index
    %c0_49 = arith.constant 0 : index
    %51 = vector.load %arg2[%c16_48, %c0_49] : memref<72x512xf32, #tpu.memory_space<vmem>>, vector<8x512xf32>
    %52 = arith.mulf %50, %51 : vector<8x512xf32>
    %c16_50 = arith.constant 16 : index
    %c0_51 = arith.constant 0 : index
    %53 = vector.load %arg8[%c16_50, %c0_51] : memref<72x512xf32, #tpu.memory_space<vmem>>, vector<8x512xf32>
    tpu.vector_store %arg8[%c16_50, %c0_51], %52 {strides = array<i32>} : memref<72x512xf32, #tpu.memory_space<vmem>>, vector<8x512xf32>,
    %c1_i32_52 = arith.constant 1 : i32
    %54 = tpu.dynamic_rotate %39 by %c1_i32_52 dim 1 : vector<8x512xf32>, i32 -> vector<8x512xf32>
    %c24_53 = arith.constant 24 : index
    %c0_54 = arith.constant 0 : index
    %55 = vector.load %arg2[%c24_53, %c0_54] : memref<72x512xf32, #tpu.memory_space<vmem>>, vector<8x512xf32>
    %56 = arith.mulf %54, %55 : vector<8x512xf32>
    %c24_55 = arith.constant 24 : index
    %c0_56 = arith.constant 0 : index
    %57 = vector.load %arg8[%c24_55, %c0_56] : memref<72x512xf32, #tpu.memory_space<vmem>>, vector<8x512xf32>
    tpu.vector_store %arg8[%c24_55, %c0_56], %56 {strides = array<i32>} : memref<72x512xf32, #tpu.memory_space<vmem>>, vector<8x512xf32>,
    %c32_57 = arith.constant 32 : index
    %c0_58 = arith.constant 0 : index
    %58 = vector.load %arg8[%c32_57, %c0_58] : memref<72x512xf32, #tpu.memory_space<vmem>>, vector<8x512xf32>
    tpu.vector_store %arg8[%c32_57, %c0_58], %39 {strides = array<i32>} : memref<72x512xf32, #tpu.memory_space<vmem>>, vector<8x512xf32>,
    %c511_i32_59 = arith.constant 511 : i32
    %59 = tpu.dynamic_rotate %39 by %c511_i32_59 dim 1 : vector<8x512xf32>, i32 -> vector<8x512xf32>
    %c40_60 = arith.constant 40 : index
    %c0_61 = arith.constant 0 : index
    %60 = vector.load %arg2[%c40_60, %c0_61] : memref<72x512xf32, #tpu.memory_space<vmem>>, vector<8x512xf32>
    %61 = arith.mulf %59, %60 : vector<8x512xf32>
    %c40_62 = arith.constant 40 : index
    %c0_63 = arith.constant 0 : index
    %62 = vector.load %arg8[%c40_62, %c0_63] : memref<72x512xf32, #tpu.memory_space<vmem>>, vector<8x512xf32>
    tpu.vector_store %arg8[%c40_62, %c0_63], %61 {strides = array<i32>} : memref<72x512xf32, #tpu.memory_space<vmem>>, vector<8x512xf32>,
    %c497_i32_64 = arith.constant 497 : i32
    %63 = tpu.dynamic_rotate %39 by %c497_i32_64 dim 1 : vector<8x512xf32>, i32 -> vector<8x512xf32>
    %c48_65 = arith.constant 48 : index
    %c0_66 = arith.constant 0 : index
    %64 = vector.load %arg2[%c48_65, %c0_66] : memref<72x512xf32, #tpu.memory_space<vmem>>, vector<8x512xf32>
    %65 = arith.mulf %63, %64 : vector<8x512xf32>
    %c48_67 = arith.constant 48 : index
    %c0_68 = arith.constant 0 : index
    %66 = vector.load %arg8[%c48_67, %c0_68] : memref<72x512xf32, #tpu.memory_space<vmem>>, vector<8x512xf32>
    tpu.vector_store %arg8[%c48_67, %c0_68], %65 {strides = array<i32>} : memref<72x512xf32, #tpu.memory_space<vmem>>, vector<8x512xf32>,
    %c496_i32_69 = arith.constant 496 : i32
    %67 = tpu.dynamic_rotate %39 by %c496_i32_69 dim 1 : vector<8x512xf32>, i32 -> vector<8x512xf32>
    %c56_70 = arith.constant 56 : index
    %c0_71 = arith.constant 0 : index
    %68 = vector.load %arg2[%c56_70, %c0_71] : memref<72x512xf32, #tpu.memory_space<vmem>>, vector<8x512xf32>
    %69 = arith.mulf %67, %68 : vector<8x512xf32>
    %c56_72 = arith.constant 56 : index
    %c0_73 = arith.constant 0 : index
    %70 = vector.load %arg8[%c56_72, %c0_73] : memref<72x512xf32, #tpu.memory_space<vmem>>, vector<8x512xf32>
    tpu.vector_store %arg8[%c56_72, %c0_73], %69 {strides = array<i32>} : memref<72x512xf32, #tpu.memory_space<vmem>>, vector<8x512xf32>,
    %c495_i32_74 = arith.constant 495 : i32
    %71 = tpu.dynamic_rotate %39 by %c495_i32_74 dim 1 : vector<8x512xf32>, i32 -> vector<8x512xf32>
    %c64_75 = arith.constant 64 : index
    %c0_76 = arith.constant 0 : index
    %72 = vector.load %arg2[%c64_75, %c0_76] : memref<72x512xf32, #tpu.memory_space<vmem>>, vector<8x512xf32>
    %73 = arith.mulf %71, %72 : vector<8x512xf32>
    %c64_77 = arith.constant 64 : index
    %c0_78 = arith.constant 0 : index
    %74 = vector.load %arg8[%c64_77, %c0_78] : memref<72x512xf32, #tpu.memory_space<vmem>>, vector<8x512xf32>
    tpu.vector_store %arg8[%c64_77, %c0_78], %73 {strides = array<i32>} : memref<72x512xf32, #tpu.memory_space<vmem>>, vector<8x512xf32>,
    %c0_79 = arith.constant 0 : index
    %c0_80 = arith.constant 0 : index
    %75 = vector.load %arg8[%c0_79, %c0_80] : memref<72x512xf32, #tpu.memory_space<vmem>>, vector<72x512xf32>
    %cst_81 = arith.constant dense<0.000000e+00> : vector<8x512xf32>
    %76 = tpu.matmul %40, %75, %cst_81 {dimension_numbers = #tpu.dot_dimension_numbers<[1], [0], [0], [1], [0, 0, 1, 1], [], []>} : vector<8x72xf32>, vector<72x512xf32>, vector<8x512xf32> -> vector<8x512xf32>
    %77 = vector.broadcast %41 : vector<8x1xf32> to vector<8x512xf32>
    %78 = arith.addf %76, %77 : vector<8x512xf32>
    %cst_82 = arith.constant 0.000000e+00 : f32
    %79 = vector.broadcast %cst_82 : f32 to vector<8x512xf32>
    %80 = arith.maximumf %78, %79 : vector<8x512xf32>
    %c0_83 = arith.constant 0 : index
    %c0_84 = arith.constant 0 : index
    %81 = vector.load %arg7[%c0_83, %c0_84] : memref<8x512xf32, #tpu.memory_space<vmem>>, vector<8x512xf32>
    tpu.vector_store %arg7[%c0_83, %c0_84], %80 {strides = array<i32>} : memref<8x512xf32, #tpu.memory_space<vmem>>, vector<8x512xf32>,
    return
  }
  func.func @transform_0(%arg0: i32) -> (i32, i32) {
    %c0_i32 = arith.constant 0 : i32
    %c0_i32_0 = arith.constant 0 : i32
    return %c0_i32, %arg0 : i32, i32
  }
  func.func @transform_1(%arg0: i32) -> (i32, i32) {
    %c0_i32 = arith.constant 0 : i32
    %c0_i32_0 = arith.constant 0 : i32
    %c0_i32_1 = arith.constant 0 : i32
    return %c0_i32, %c0_i32_0 : i32, i32
  }
  func.func @transform_2(%arg0: i32) -> (i32, i32) {
    %c0_i32 = arith.constant 0 : i32
    %c0_i32_0 = arith.constant 0 : i32
    %c0_i32_1 = arith.constant 0 : i32
    return %c0_i32, %c0_i32_0 : i32, i32
  }
  func.func @transform_3(%arg0: i32) -> (i32, i32) {
    %c0_i32 = arith.constant 0 : i32
    %c0_i32_0 = arith.constant 0 : i32
    %c0_i32_1 = arith.constant 0 : i32
    return %c0_i32, %c0_i32_0 : i32, i32
  }
  func.func @transform_4(%arg0: i32) -> (i32, i32) {
    %c0_i32 = arith.constant 0 : i32
    %c0_i32_0 = arith.constant 0 : i32
    %c0_i32_1 = arith.constant 0 : i32
    return %c0_i32, %c0_i32_0 : i32, i32
  }
  func.func @transform_5(%arg0: i32) -> (i32, i32) {
    %c0_i32 = arith.constant 0 : i32
    %c0_i32_0 = arith.constant 0 : i32
    %c0_i32_1 = arith.constant 0 : i32
    return %c0_i32, %c0_i32_0 : i32, i32
  }
  func.func @transform_6(%arg0: i32) -> (i32, i32) {
    %c0_i32 = arith.constant 0 : i32
    %c0_i32_0 = arith.constant 0 : i32
    return %c0_i32, %arg0 : i32, i32
  }
}

</mosaic_0001>

<llo_original>
// kernel: tpu_custom_call.1
$region0: #{tpu_custom_call.1}
  #allocation0 [shape = 'u32[]', space=smem, size = 0x4, offset = 0x4, fixed_abs, tag = 'smem constant byte address 0x4 - core index']
  #allocation1 [shape = 'u32[144,128]{1,0:T(1,128)}', space=vmem, size = 0x12000, scoped, tag = 'internal scratch']
  #allocation2 [shape = 'f32[72,512]{1,0:T(8,128)}', space=vmem, size = 0x24000, scoped, tag = 'scratch operand']
  %s0 = inlined_call_operand.hbm [shape: f32[8,512], index: 0, kind: input, shape index: {}]
  %s1 = inlined_call_operand.hbm [shape: f32[72,512], index: 1, kind: input, shape index: {}]
  %s2 = inlined_call_operand.vmem [shape: f32[8,72], index: 2, kind: input, shape index: {}]
  %s3 = inlined_call_operand.vmem [shape: f32[8,1], index: 3, kind: input, shape index: {}]
  %s4 = inlined_call_operand.vmem [shape: f32[8,72], index: 4, kind: input, shape index: {}]
  %s5 = inlined_call_operand.vmem [shape: f32[8,1], index: 5, kind: input, shape index: {}]
  %s6 = inlined_call_operand.hbm [shape: f32[8,512], index: 6, kind: output, shape index: {}]
  %s7 = sld [smem:[#allocation0]]
  $region42: #{tpu_custom_call.1} parent=0
    _
  %s9 = ssub.s32 1, %s7
  %s10 = scalar_select 0, %s9, %s7
  $region1: #{tpu_custom_call.1} parent=0
    #allocation3 [shape = 'u8[16384]{0}', space=vmem, size = 0x4000, scoped, tag = 'input window, operand 0, single buffered']
    #allocation4 [shape = 's32[1]{0}', space=sflag, size = 0x4, scoped, tag = 'scoped memory for tpu_custom_call.1']
    #allocation5 [shape = 's32[1]{0}', space=sflag, size = 0x4, scoped, tag = 'scoped memory for tpu_custom_call.1']
    #allocation6 [shape = 'u8[147456]{0}', space=vmem, size = 0x24000, scoped, tag = 'input window, operand 1, single buffered']
    #allocation7 [shape = 's32[1]{0}', space=sflag, size = 0x4, scoped, tag = 'scoped memory for tpu_custom_call.1']
    #allocation8 [shape = 'u8[16384]{0}', space=vmem, size = 0x4000, scoped, tag = 'output window, operand 0, single buffered']
    %11 = vsyncpa [#allocation4], 0
    %12 = vsyncpa [#allocation7], 0
    %13 = vsyncpa [#allocation5], 0
    // Predicated region
    $region2: #{tpu_custom_call.1} parent=1 // pred_check
      _
    $region3: #{tpu_custom_call.1} parent=1 // pred_check_branch
      %15 = sbr.rel (0) target = $region5
    $region4: #{tpu_custom_call.1} parent=1 // pred_region
      %s17 = ssub.s32 512, 512
      %18 = vsyncadd [#allocation4], %s17
      %s20 = sshll.u32 [#allocation3], 4
      %s21 = int_to_ptr.vmem [resolvable:$true] %s20
      %23 = dma.hbm_to_vmem [thread:$0]  %s0, 512, %s21, [#allocation4]
    $region5: #{tpu_custom_call.1} parent=1 // pred_fallthru
      _
    // Predicated region
    $region6: #{tpu_custom_call.1} parent=1 // pred_check
      _
    $region7: #{tpu_custom_call.1} parent=1 // pred_check_branch
      %25 = sbr.rel (0) target = $region9
    $region8: #{tpu_custom_call.1} parent=1 // pred_region
      %s27 = ssub.s32 4608, 4608
      %28 = vsyncadd [#allocation7], %s27
      %s29 = sshll.u32 [#allocation6], 4
      %s30 = int_to_ptr.vmem [resolvable:$true] %s29
      %35 = dma.hbm_to_vmem [thread:$0]  %s1, 4608, %s30, [#allocation7], 512, 512, 32
    $region9: #{tpu_custom_call.1} parent=1 // pred_fallthru
      _
    // Predicated region
    $region10: #{tpu_custom_call.1} parent=1 // pred_check
      _
    $region11: #{tpu_custom_call.1} parent=1 // pred_check_branch
      %37 = sbr.rel (0) target = $region13
    $region12: #{tpu_custom_call.1} parent=1 // pred_region
      _
    $region13: #{tpu_custom_call.1} parent=1 // pred_fallthru
      _
    // Predicated region
    $region14: #{tpu_custom_call.1} parent=1 // pred_check
      _
    $region15: #{tpu_custom_call.1} parent=1 // pred_check_branch
      %39 = sbr.rel (0) target = $region17
    $region16: #{tpu_custom_call.1} parent=1 // pred_region
      _
    $region17: #{tpu_custom_call.1} parent=1 // pred_fallthru
      _
    // Predicated region
    $region18: #{tpu_custom_call.1} parent=1 // pred_check
      _
    $region19: #{tpu_custom_call.1} parent=1 // pred_check_branch
      %41 = sbr.rel (0) target = $region21
    $region20: #{tpu_custom_call.1} parent=1 // pred_region
      _
    $region21: #{tpu_custom_call.1} parent=1 // pred_fallthru
      _
    // Predicated region
    $region22: #{tpu_custom_call.1} parent=1 // pred_check
      _
    $region23: #{tpu_custom_call.1} parent=1 // pred_check_branch
      %43 = sbr.rel (0) target = $region25
    $region24: #{tpu_custom_call.1} parent=1 // pred_region
      _
    $region25: #{tpu_custom_call.1} parent=1 // pred_fallthru
      _
    // Predicated region
    $region26: #{tpu_custom_call.1} parent=1 // pred_check
      _
    $region27: #{tpu_custom_call.1} parent=1 // pred_check_branch
      %45 = sbr.rel (0) target = $region29
    $region28: #{tpu_custom_call.1} parent=1 // pred_region
      %46 = dma.done [#allocation4], 512
    $region29: #{tpu_custom_call.1} parent=1 // pred_fallthru
      _
    // Predicated region
    $region30: #{tpu_custom_call.1} parent=1 // pred_check
      _
    $region31: #{tpu_custom_call.1} parent=1 // pred_check_branch
      %48 = sbr.rel (0) target = $region33
    $region32: #{tpu_custom_call.1} parent=1 // pred_region
      %49 = dma.done [#allocation7], 4608
    $region33: #{tpu_custom_call.1} parent=1 // pred_fallthru
      _
    %v50 = vld [vmem:[#allocation3] sm:$0xff]
    %v51 = vld [vmem:[#allocation3 + $0x8] sm:$0xff]
    %v52 = vld [vmem:[#allocation3 + $0x10] sm:$0xff]
    %v53 = vld [vmem:[#allocation3 + $0x18] sm:$0xff]
    %v54 = vld [vmem:[%s2] sm:$0xff]
    %v55 = vld [vmem:[%s3] sm:$0xff]
    %56 = vrot.lane.b32.xlu0 %v50, 17
    %v57 = vpop.permute.xlu0 %56
    %58 = vrot.lane.b32.xlu0 %v51, 17
    %v59 = vpop.permute.xlu0 %58
    %60 = vrot.lane.b32.xlu0 %v52, 17
    %v61 = vpop.permute.xlu0 %60
    %62 = vrot.lane.b32.xlu0 %v53, 17
    %v63 = vpop.permute.xlu0 %62
    %v64 = vlaneseq
    %v65 = vand.u32 %v64, 127
    %vm66 = vcmp.lt.s32.totalorder %v65, 17
    %v67 = vsel %vm66, %v61, %v63
    %v68 = vsel %vm66, %v59, %v61
    %v69 = vsel %vm66, %v57, %v59
    %v70 = vsel %vm66, %v63, %v57
    %v71 = vld [vmem:[#allocation6] sm:$0xff]
    %v72 = vld [vmem:[#allocation6 + $0x8] sm:$0xff]
    %v73 = vld [vmem:[#allocation6 + $0x10] sm:$0xff]
    %v74 = vld [vmem:[#allocation6 + $0x18] sm:$0xff]
    %v75 = vmul.f32 %v70, %v71
    %v76 = vmul.f32 %v69, %v72
    %v77 = vmul.f32 %v68, %v73
    %v78 = vmul.f32 %v67, %v74
    %79 = vst [vmem:[#allocation2] sm:$0xff] %v75
    %80 = vst [vmem:[#allocation2 + $0x8] sm:$0xff] %v76
    %81 = vst [vmem:[#allocation2 + $0x10] sm:$0xff] %v77
    %82 = vst [vmem:[#allocation2 + $0x18] sm:$0xff] %v78
    %83 = vrot.lane.b32.xlu0 %v50, 16
    %v84 = vpop.permute.xlu0 %83
    %85 = vrot.lane.b32.xlu0 %v51, 16
    %v86 = vpop.permute.xlu0 %85
    %87 = vrot.lane.b32.xlu0 %v52, 16
    %v88 = vpop.permute.xlu0 %87
    %89 = vrot.lane.b32.xlu0 %v53, 16
    %v90 = vpop.permute.xlu0 %89
    %vm91 = vcmp.lt.s32.totalorder %v65, 16
    %v92 = vsel %vm91, %v88, %v90
    %v93 = vsel %vm91, %v86, %v88
    %v94 = vsel %vm91, %v84, %v86
    %v95 = vsel %vm91, %v90, %v84
    %v96 = vld [vmem:[#allocation6 + $0x20] sm:$0xff]
    %v97 = vld [vmem:[#allocation6 + $0x28] sm:$0xff]
    %v98 = vld [vmem:[#allocation6 + $0x30] sm:$0xff]
    %v99 = vld [vmem:[#allocation6 + $0x38] sm:$0xff]
    %v100 = vmul.f32 %v95, %v96
    %v101 = vmul.f32 %v94, %v97
    %v102 = vmul.f32 %v93, %v98
    %v103 = vmul.f32 %v92, %v99
    %104 = vst [vmem:[#allocation2 + $0x20] sm:$0xff] %v100
    %105 = vst [vmem:[#allocation2 + $0x28] sm:$0xff] %v101
    %106 = vst [vmem:[#allocation2 + $0x30] sm:$0xff] %v102
    %107 = vst [vmem:[#allocation2 + $0x38] sm:$0xff] %v103
    %108 = vrot.lane.b32.xlu0 %v50, 15
    %v109 = vpop.permute.xlu0 %108
    %110 = vrot.lane.b32.xlu0 %v51, 15
    %v111 = vpop.permute.xlu0 %110
    %112 = vrot.lane.b32.xlu0 %v52, 15
    %v113 = vpop.permute.xlu0 %112
    %114 = vrot.lane.b32.xlu0 %v53, 15
    %v115 = vpop.permute.xlu0 %114
    %vm116 = vcmp.lt.s32.totalorder %v65, 15
    %v117 = vsel %vm116, %v113, %v115
    %v118 = vsel %vm116, %v111, %v113
    %v119 = vsel %vm116, %v109, %v111
    %v120 = vsel %vm116, %v115, %v109
    %v121 = vld [vmem:[#allocation6 + $0x40] sm:$0xff]
    %v122 = vld [vmem:[#allocation6 + $0x48] sm:$0xff]
    %v123 = vld [vmem:[#allocation6 + $0x50] sm:$0xff]
    %v124 = vld [vmem:[#allocation6 + $0x58] sm:$0xff]
    %v125 = vmul.f32 %v120, %v121
    %v126 = vmul.f32 %v119, %v122
    %v127 = vmul.f32 %v118, %v123
    %v128 = vmul.f32 %v117, %v124
    %129 = vst [vmem:[#allocation2 + $0x40] sm:$0xff] %v125
    %130 = vst [vmem:[#allocation2 + $0x48] sm:$0xff] %v126
    %131 = vst [vmem:[#allocation2 + $0x50] sm:$0xff] %v127
    %132 = vst [vmem:[#allocation2 + $0x58] sm:$0xff] %v128
    %133 = vrot.lane.b32.xlu0 %v50, 1
    %v134 = vpop.permute.xlu0 %133
    %135 = vrot.lane.b32.xlu0 %v51, 1
    %v136 = vpop.permute.xlu0 %135
    %137 = vrot.lane.b32.xlu0 %v52, 1
    %v138 = vpop.permute.xlu0 %137
    %139 = vrot.lane.b32.xlu0 %v53, 1
    %v140 = vpop.permute.xlu0 %139
    %vm141 = vcmp.lt.s32.totalorder %v65, 1
    %v142 = vsel %vm141, %v138, %v140
    %v143 = vsel %vm141, %v136, %v138
    %v144 = vsel %vm141, %v134, %v136
    %v145 = vsel %vm141, %v140, %v134
    %v146 = vld [vmem:[#allocation6 + $0x60] sm:$0xff]
    %v147 = vld [vmem:[#allocation6 + $0x68] sm:$0xff]
    %v148 = vld [vmem:[#allocation6 + $0x70] sm:$0xff]
    %v149 = vld [vmem:[#allocation6 + $0x78] sm:$0xff]
    %v150 = vmul.f32 %v145, %v146
    %v151 = vmul.f32 %v144, %v147
    %v152 = vmul.f32 %v143, %v148
    %v153 = vmul.f32 %v142, %v149
    %154 = vst [vmem:[#allocation2 + $0x60] sm:$0xff] %v150
    %155 = vst [vmem:[#allocation2 + $0x68] sm:$0xff] %v151
    %156 = vst [vmem:[#allocation2 + $0x70] sm:$0xff] %v152
    %157 = vst [vmem:[#allocation2 + $0x78] sm:$0xff] %v153
    %158 = vst [vmem:[#allocation2 + $0x80] sm:$0xff] %v50
    %159 = vst [vmem:[#allocation2 + $0x88] sm:$0xff] %v51
    %160 = vst [vmem:[#allocation2 + $0x90] sm:$0xff] %v52
    %161 = vst [vmem:[#allocation2 + $0x98] sm:$0xff] %v53
    %162 = vrot.lane.b32.xlu0 %v50, 127
    %v163 = vpop.permute.xlu0 %162
    %164 = vrot.lane.b32.xlu0 %v51, 127
    %v165 = vpop.permute.xlu0 %164
    %166 = vrot.lane.b32.xlu0 %v52, 127
    %v167 = vpop.permute.xlu0 %166
    %168 = vrot.lane.b32.xlu0 %v53, 127
    %v169 = vpop.permute.xlu0 %168
    %vm170 = vcmp.lt.s32.totalorder %v65, 127
    %v171 = vsel %vm170, %v167, %v169
    %v172 = vsel %vm170, %v165, %v167
    %v173 = vsel %vm170, %v163, %v165
    %v174 = vsel %vm170, %v169, %v163
    %v175 = vld [vmem:[#allocation6 + $0xa0] sm:$0xff]
    %v176 = vld [vmem:[#allocation6 + $0xa8] sm:$0xff]
    %v177 = vld [vmem:[#allocation6 + $0xb0] sm:$0xff]
    %v178 = vld [vmem:[#allocation6 + $0xb8] sm:$0xff]
    %v179 = vmul.f32 %v173, %v175
    %v180 = vmul.f32 %v172, %v176
    %v181 = vmul.f32 %v171, %v177
    %v182 = vmul.f32 %v174, %v178
    %183 = vst [vmem:[#allocation2 + $0xa0] sm:$0xff] %v179
    %184 = vst [vmem:[#allocation2 + $0xa8] sm:$0xff] %v180
    %185 = vst [vmem:[#allocation2 + $0xb0] sm:$0xff] %v181
    %186 = vst [vmem:[#allocation2 + $0xb8] sm:$0xff] %v182
    %187 = vrot.lane.b32.xlu0 %v50, 113
    %v188 = vpop.permute.xlu0 %187
    %189 = vrot.lane.b32.xlu0 %v51, 113
    %v190 = vpop.permute.xlu0 %189
    %191 = vrot.lane.b32.xlu0 %v52, 113
    %v192 = vpop.permute.xlu0 %191
    %193 = vrot.lane.b32.xlu0 %v53, 113
    %v194 = vpop.permute.xlu0 %193
    %vm195 = vcmp.lt.s32.totalorder %v65, 113
    %v196 = vsel %vm195, %v192, %v194
    %v197 = vsel %vm195, %v190, %v192
    %v198 = vsel %vm195, %v188, %v190
    %v199 = vsel %vm195, %v194, %v188
    %v200 = vld [vmem:[#allocation6 + $0xc0] sm:$0xff]
    %v201 = vld [vmem:[#allocation6 + $0xc8] sm:$0xff]
    %v202 = vld [vmem:[#allocation6 + $0xd0] sm:$0xff]
    %v203 = vld [vmem:[#allocation6 + $0xd8] sm:$0xff]
    %v204 = vmul.f32 %v198, %v200
    %v205 = vmul.f32 %v197, %v201
    %v206 = vmul.f32 %v196, %v202
    %v207 = vmul.f32 %v199, %v203
    %208 = vst [vmem:[#allocation2 + $0xc0] sm:$0xff] %v204
    %209 = vst [vmem:[#allocation2 + $0xc8] sm:$0xff] %v205
    %210 = vst [vmem:[#allocation2 + $0xd0] sm:$0xff] %v206
    %211 = vst [vmem:[#allocation2 + $0xd8] sm:$0xff] %v207
    %212 = vrot.lane.b32.xlu0 %v50, 112
    %v213 = vpop.permute.xlu0 %212
    %214 = vrot.lane.b32.xlu0 %v51, 112
    %v215 = vpop.permute.xlu0 %214
    %216 = vrot.lane.b32.xlu0 %v52, 112
    %v217 = vpop.permute.xlu0 %216
    %218 = vrot.lane.b32.xlu0 %v53, 112
    %v219 = vpop.permute.xlu0 %218
    %vm220 = vcmp.lt.s32.totalorder %v65, 112
    %v221 = vsel %vm220, %v217, %v219
    %v222 = vsel %vm220, %v215, %v217
    %v223 = vsel %vm220, %v213, %v215
    %v224 = vsel %vm220, %v219, %v213
    %v225 = vld [vmem:[#allocation6 + $0xe0] sm:$0xff]
    %v226 = vld [vmem:[#allocation6 + $0xe8] sm:$0xff]
    %v227 = vld [vmem:[#allocation6 + $0xf0] sm:$0xff]
    %v228 = vld [vmem:[#allocation6 + $0xf8] sm:$0xff]
    %v229 = vmul.f32 %v223, %v225
    %v230 = vmul.f32 %v222, %v226
    %v231 = vmul.f32 %v221, %v227
    %v232 = vmul.f32 %v224, %v228
    %233 = vst [vmem:[#allocation2 + $0xe0] sm:$0xff] %v229
    %234 = vst [vmem:[#allocation2 + $0xe8] sm:$0xff] %v230
    %235 = vst [vmem:[#allocation2 + $0xf0] sm:$0xff] %v231
    %236 = vst [vmem:[#allocation2 + $0xf8] sm:$0xff] %v232
    %237 = vrot.lane.b32.xlu0 %v50, 111
    %v238 = vpop.permute.xlu0 %237
    %239 = vrot.lane.b32.xlu0 %v51, 111
    %v240 = vpop.permute.xlu0 %239
    %241 = vrot.lane.b32.xlu0 %v52, 111
    %v242 = vpop.permute.xlu0 %241
    %243 = vrot.lane.b32.xlu0 %v53, 111
    %v244 = vpop.permute.xlu0 %243
    %vm245 = vcmp.lt.s32.totalorder %v65, 111
    %v246 = vsel %vm245, %v242, %v244
    %v247 = vsel %vm245, %v240, %v242
    %v248 = vsel %vm245, %v238, %v240
    %v249 = vsel %vm245, %v244, %v238
    %v250 = vld [vmem:[#allocation6 + $0x100] sm:$0xff]
    %v251 = vld [vmem:[#allocation6 + $0x108] sm:$0xff]
    %v252 = vld [vmem:[#allocation6 + $0x110] sm:$0xff]
    %v253 = vld [vmem:[#allocation6 + $0x118] sm:$0xff]
    %v254 = vmul.f32 %v248, %v250
    %v255 = vmul.f32 %v247, %v251
    %v256 = vmul.f32 %v246, %v252
    %v257 = vmul.f32 %v249, %v253
    %258 = vst [vmem:[#allocation2 + $0x100] sm:$0xff] %v254
    %259 = vst [vmem:[#allocation2 + $0x108] sm:$0xff] %v255
    %260 = vst [vmem:[#allocation2 + $0x110] sm:$0xff] %v256
    %261 = vst [vmem:[#allocation2 + $0x118] sm:$0xff] %v257
    %v262 = vld [vmem:[#allocation2] sm:$0xff]
    %v263 = vld [vmem:[#allocation2 + $0x8] sm:$0xff]
    %v264 = vld [vmem:[#allocation2 + $0x10] sm:$0xff]
    %v265 = vld [vmem:[#allocation2 + $0x18] sm:$0xff]
    %v266 = vld [vmem:[#allocation2 + $0x20] sm:$0xff]
    %v267 = vld [vmem:[#allocation2 + $0x28] sm:$0xff]
    %v268 = vld [vmem:[#allocation2 + $0x30] sm:$0xff]
    %v269 = vld [vmem:[#allocation2 + $0x38] sm:$0xff]
    %v270 = vld [vmem:[#allocation2 + $0x40] sm:$0xff]
    %v271 = vld [vmem:[#allocation2 + $0x48] sm:$0xff]
    %v272 = vld [vmem:[#allocation2 + $0x50] sm:$0xff]
    %v273 = vld [vmem:[#allocation2 + $0x58] sm:$0xff]
    %v274 = vld [vmem:[#allocation2 + $0x60] sm:$0xff]
    %v275 = vld [vmem:[#allocation2 + $0x68] sm:$0xff]
    %v276 = vld [vmem:[#allocation2 + $0x70] sm:$0xff]
    %v277 = vld [vmem:[#allocation2 + $0x78] sm:$0xff]
    %v278 = vld [vmem:[#allocation2 + $0x80] sm:$0xff]
    %v279 = vld [vmem:[#allocation2 + $0x88] sm:$0xff]
    %v280 = vld [vmem:[#allocation2 + $0x90] sm:$0xff]
    %v281 = vld [vmem:[#allocation2 + $0x98] sm:$0xff]
    %v282 = vld [vmem:[#allocation2 + $0xa0] sm:$0xff]
    %v283 = vld [vmem:[#allocation2 + $0xa8] sm:$0xff]
    %v284 = vld [vmem:[#allocation2 + $0xb0] sm:$0xff]
    %v285 = vld [vmem:[#allocation2 + $0xb8] sm:$0xff]
    %v286 = vld [vmem:[#allocation2 + $0xc0] sm:$0xff]
    %v287 = vld [vmem:[#allocation2 + $0xc8] sm:$0xff]
    %v288 = vld [vmem:[#allocation2 + $0xd0] sm:$0xff]
    %v289 = vld [vmem:[#allocation2 + $0xd8] sm:$0xff]
    %v290 = vld [vmem:[#allocation2 + $0xe0] sm:$0xff]
    %v291 = vld [vmem:[#allocation2 + $0xe8] sm:$0xff]
    %v292 = vld [vmem:[#allocation2 + $0xf0] sm:$0xff]
    %v293 = vld [vmem:[#allocation2 + $0xf8] sm:$0xff]
    %v294 = vld [vmem:[#allocation2 + $0x100] sm:$0xff]
    %v295 = vld [vmem:[#allocation2 + $0x108] sm:$0xff]
    %v296 = vld [vmem:[#allocation2 + $0x110] sm:$0xff]
    %v297 = vld [vmem:[#allocation2 + $0x118] sm:$0xff]
    %299 = vset.pattern.permute.xlu0 0
    %300 = vperm.xlu0 %299, %v55
    %v301 = vpop.permute.xlu0 %300
    %vm303 = vcmask 588800
    %v305 = vsel %vm303, %v54, 0
    %307 = vmatprep.subr.mxu0 0.0
    %308 = vmatpush1.msra.mxu0 0.0
    %309 = vmatprep.subr.mxu0 0.0
    %310 = vmatpush1.msra.mxu0 0.0
    %311 = vmatprep.subr.mxu0 0.0
    %312 = vmatpush1.msra.mxu0 0.0
    %313 = vmatprep.subr.mxu0 0.0
    %314 = vmatpush1.msra.mxu0 0.0
    %315 = vmatprep.subr.mxu0 0.0
    %316 = vmatpush1.msra.mxu0 0.0
    %317 = vmatprep.subr.mxu0 0.0
    %318 = vmatpush1.msra.mxu0 0.0
    %319 = vmatprep.subr.mxu0 0.0
    %320 = vmatpush1.msra.mxu0 0.0
    %321 = vmatprep.subr.mxu0 %v295
    %322 = vmatpush1.msra.mxu0 %v294
    %323 = vmatprep.subr.mxu0 %v291
    %324 = vmatpush1.msra.mxu0 %v290
    %325 = vmatprep.subr.mxu0 %v287
    %326 = vmatpush1.msra.mxu0 %v286
    %327 = vmatprep.subr.mxu0 %v283
    %328 = vmatpush1.msra.mxu0 %v282
    %329 = vmatprep.subr.mxu0 %v279
    %330 = vmatpush1.msra.mxu0 %v278
    %331 = vmatprep.subr.mxu0 %v275
    %332 = vmatpush1.msra.mxu0 %v274
    %333 = vmatprep.subr.mxu0 %v271
    %334 = vmatpush1.msra.mxu0 %v270
    %335 = vmatprep.subr.mxu0 %v267
    %336 = vmatpush1.msra.mxu0 %v266
    %337 = vmatprep.subr.mxu0 %v263
    %338 = vmatpush1.msra.mxu0 %v262
    %339 = vmatprep.subr.mxu0 0.0
    %340 = vmatpush2.msra.mxu0 0.0
    %341 = vmatprep.subr.mxu0 0.0
    %342 = vmatpush2.msra.mxu0 0.0
    %343 = vmatprep.subr.mxu0 0.0
    %344 = vmatpush2.msra.mxu0 0.0
    %345 = vmatprep.subr.mxu0 0.0
    %346 = vmatpush2.msra.mxu0 0.0
    %347 = vmatprep.subr.mxu0 0.0
    %348 = vmatpush2.msra.mxu0 0.0
    %349 = vmatprep.subr.mxu0 0.0
    %350 = vmatpush2.msra.mxu0 0.0
    %351 = vmatprep.subr.mxu0 0.0
    %352 = vmatpush2.msra.mxu0 0.0
    %353 = vmatprep.subr.mxu0 0.0
    %354 = vmatpush2.msra.mxu0 0.0
    %355 = vmatprep.subr.mxu0 0.0
    %356 = vmatpush2.msra.mxu0 0.0
    %357 = vmatprep.subr.mxu0 0.0
    %358 = vmatpush2.msra.mxu0 0.0
    %359 = vmatprep.subr.mxu0 0.0
    %360 = vmatpush2.msra.mxu0 0.0
    %361 = vmatprep.subr.mxu0 0.0
    %362 = vmatpush2.msra.mxu0 0.0
    %363 = vmatprep.subr.mxu0 0.0
    %364 = vmatpush2.msra.mxu0 0.0
    %365 = vmatprep.subr.mxu0 0.0
    %366 = vmatpush2.msra.mxu0 0.0
    %367 = vmatprep.subr.mxu0 0.0
    %368 = vmatpush2.msra.mxu0 0.0
    %369 = vmatprep.subr.mxu0 0.0
    %370 = vmatpush2.msra.mxu0 0.0
    %371 = vmatprep.mubr.f32.mxu0 0.0
    %372 = vmatmul.mubr.f32.gmra.mxu0 %v305
    %v373 = vpop.f32.mrf.mxu0
    %v374 = vadd.f32 %v301, %v373
    %v375 = vpop.f32.mrf.mxu0
    %v376 = vadd.f32 %v301, %v375
    %377 = vdwg.mxu0
    %378 = vmatprep.subr.mxu0 0.0
    %379 = vmatpush1.msra.mxu0 0.0
    %380 = vmatprep.subr.mxu0 0.0
    %381 = vmatpush1.msra.mxu0 0.0
    %382 = vmatprep.subr.mxu0 0.0
    %383 = vmatpush1.msra.mxu0 0.0
    %384 = vmatprep.subr.mxu0 0.0
    %385 = vmatpush1.msra.mxu0 0.0
    %386 = vmatprep.subr.mxu0 0.0
    %387 = vmatpush1.msra.mxu0 0.0
    %388 = vmatprep.subr.mxu0 0.0
    %389 = vmatpush1.msra.mxu0 0.0
    %390 = vmatprep.subr.mxu0 0.0
    %391 = vmatpush1.msra.mxu0 0.0
    %392 = vmatprep.subr.mxu0 %v297
    %393 = vmatpush1.msra.mxu0 %v296
    %394 = vmatprep.subr.mxu0 %v293
    %395 = vmatpush1.msra.mxu0 %v292
    %396 = vmatprep.subr.mxu0 %v289
    %397 = vmatpush1.msra.mxu0 %v288
    %398 = vmatprep.subr.mxu0 %v285
    %399 = vmatpush1.msra.mxu0 %v284
    %400 = vmatprep.subr.mxu0 %v281
    %401 = vmatpush1.msra.mxu0 %v280
    %402 = vmatprep.subr.mxu0 %v277
    %403 = vmatpush1.msra.mxu0 %v276
    %404 = vmatprep.subr.mxu0 %v273
    %405 = vmatpush1.msra.mxu0 %v272
    %406 = vmatprep.subr.mxu0 %v269
    %407 = vmatpush1.msra.mxu0 %v268
    %408 = vmatprep.subr.mxu0 %v265
    %409 = vmatpush1.msra.mxu0 %v264
    %410 = vmatprep.subr.mxu0 0.0
    %411 = vmatpush2.msra.mxu0 0.0
    %412 = vmatprep.subr.mxu0 0.0
    %413 = vmatpush2.msra.mxu0 0.0
    %414 = vmatprep.subr.mxu0 0.0
    %415 = vmatpush2.msra.mxu0 0.0
    %416 = vmatprep.subr.mxu0 0.0
    %417 = vmatpush2.msra.mxu0 0.0
    %418 = vmatprep.subr.mxu0 0.0
    %419 = vmatpush2.msra.mxu0 0.0
    %420 = vmatprep.subr.mxu0 0.0
    %421 = vmatpush2.msra.mxu0 0.0
    %422 = vmatprep.subr.mxu0 0.0
    %423 = vmatpush2.msra.mxu0 0.0
    %424 = vmatprep.subr.mxu0 0.0
    %425 = vmatpush2.msra.mxu0 0.0
    %426 = vmatprep.subr.mxu0 0.0
    %427 = vmatpush2.msra.mxu0 0.0
    %428 = vmatprep.subr.mxu0 0.0
    %429 = vmatpush2.msra.mxu0 0.0
    %430 = vmatprep.subr.mxu0 0.0
    %431 = vmatpush2.msra.mxu0 0.0
    %432 = vmatprep.subr.mxu0 0.0
    %433 = vmatpush2.msra.mxu0 0.0
    %434 = vmatprep.subr.mxu0 0.0
    %435 = vmatpush2.msra.mxu0 0.0
    %436 = vmatprep.subr.mxu0 0.0
    %437 = vmatpush2.msra.mxu0 0.0
    %438 = vmatprep.subr.mxu0 0.0
    %439 = vmatpush2.msra.mxu0 0.0
    %440 = vmatprep.subr.mxu0 0.0
    %441 = vmatpush2.msra.mxu0 0.0
    %442 = vmatprep.mubr.f32.mxu0 0.0
    %443 = vmatmul.mubr.f32.gmra.mxu0 %v305
    %v444 = vpop.f32.mrf.mxu0
    %v445 = vadd.f32 %v301, %v444
    %v446 = vpop.f32.mrf.mxu0
    %v447 = vadd.f32 %v301, %v446
    %448 = vdwg.mxu0
    %v449 = vld [vmem:[%s4] sm:$0xff]
    %v450 = vld [vmem:[%s5] sm:$0xff]
    %451 = vrot.lane.b32.xlu0 %v374, 17
    %v452 = vpop.permute.xlu0 %451
    %453 = vrot.lane.b32.xlu0 %v376, 17
    %v454 = vpop.permute.xlu0 %453
    %455 = vrot.lane.b32.xlu0 %v445, 17
    %v456 = vpop.permute.xlu0 %455
    %457 = vrot.lane.b32.xlu0 %v447, 17
    %v458 = vpop.permute.xlu0 %457
    %v459 = vsel %vm66, %v456, %v458
    %v460 = vsel %vm66, %v454, %v456
    %v461 = vsel %vm66, %v452, %v454
    %v462 = vsel %vm66, %v458, %v452
    %v463 = vld [vmem:[#allocation6] sm:$0xff]
    %v464 = vld [vmem:[#allocation6 + $0x8] sm:$0xff]
    %v465 = vld [vmem:[#allocation6 + $0x10] sm:$0xff]
    %v466 = vld [vmem:[#allocation6 + $0x18] sm:$0xff]
    %v467 = vmul.f32 %v462, %v463
    %v468 = vmul.f32 %v461, %v464
    %v469 = vmul.f32 %v460, %v465
    %v470 = vmul.f32 %v459, %v466
    %471 = vst [vmem:[#allocation2] sm:$0xff] %v467
    %472 = vst [vmem:[#allocation2 + $0x8] sm:$0xff] %v468
    %473 = vst [vmem:[#allocation2 + $0x10] sm:$0xff] %v469
    %474 = vst [vmem:[#allocation2 + $0x18] sm:$0xff] %v470
    %475 = vrot.lane.b32.xlu0 %v374, 16
    %v476 = vpop.permute.xlu0 %475
    %477 = vrot.lane.b32.xlu0 %v376, 16
    %v478 = vpop.permute.xlu0 %477
    %479 = vrot.lane.b32.xlu0 %v445, 16
    %v480 = vpop.permute.xlu0 %479
    %481 = vrot.lane.b32.xlu0 %v447, 16
    %v482 = vpop.permute.xlu0 %481
    %v483 = vsel %vm91, %v480, %v482
    %v484 = vsel %vm91, %v478, %v480
    %v485 = vsel %vm91, %v476, %v478
    %v486 = vsel %vm91, %v482, %v476
    %v487 = vld [vmem:[#allocation6 + $0x20] sm:$0xff]
    %v488 = vld [vmem:[#allocation6 + $0x28] sm:$0xff]
    %v489 = vld [vmem:[#allocation6 + $0x30] sm:$0xff]
    %v490 = vld [vmem:[#allocation6 + $0x38] sm:$0xff]
    %v491 = vmul.f32 %v486, %v487
    %v492 = vmul.f32 %v485, %v488
    %v493 = vmul.f32 %v484, %v489
    %v494 = vmul.f32 %v483, %v490
    %495 = vst [vmem:[#allocation2 + $0x20] sm:$0xff] %v491
    %496 = vst [vmem:[#allocation2 + $0x28] sm:$0xff] %v492
    %497 = vst [vmem:[#allocation2 + $0x30] sm:$0xff] %v493
    %498 = vst [vmem:[#allocation2 + $0x38] sm:$0xff] %v494
    %499 = vrot.lane.b32.xlu0 %v374, 15
    %v500 = vpop.permute.xlu0 %499
    %501 = vrot.lane.b32.xlu0 %v376, 15
    %v502 = vpop.permute.xlu0 %501
    %503 = vrot.lane.b32.xlu0 %v445, 15
    %v504 = vpop.permute.xlu0 %503
    %505 = vrot.lane.b32.xlu0 %v447, 15
    %v506 = vpop.permute.xlu0 %505
    %v507 = vsel %vm116, %v504, %v506
    %v508 = vsel %vm116, %v502, %v504
    %v509 = vsel %vm116, %v500, %v502
    %v510 = vsel %vm116, %v506, %v500
    %v511 = vld [vmem:[#allocation6 + $0x40] sm:$0xff]
    %v512 = vld [vmem:[#allocation6 + $0x48] sm:$0xff]
    %v513 = vld [vmem:[#allocation6 + $0x50] sm:$0xff]
    %v514 = vld [vmem:[#allocation6 + $0x58] sm:$0xff]
    %v515 = vmul.f32 %v510, %v511
    %v516 = vmul.f32 %v509, %v512
    %v517 = vmul.f32 %v508, %v513
    %v518 = vmul.f32 %v507, %v514
    %519 = vst [vmem:[#allocation2 + $0x40] sm:$0xff] %v515
    %520 = vst [vmem:[#allocation2 + $0x48] sm:$0xff] %v516
    %521 = vst [vmem:[#allocation2 + $0x50] sm:$0xff] %v517
    %522 = vst [vmem:[#allocation2 + $0x58] sm:$0xff] %v518
    %523 = vrot.lane.b32.xlu0 %v374, 1
    %v524 = vpop.permute.xlu0 %523
    %525 = vrot.lane.b32.xlu0 %v376, 1
    %v526 = vpop.permute.xlu0 %525
    %527 = vrot.lane.b32.xlu0 %v445, 1
    %v528 = vpop.permute.xlu0 %527
    %529 = vrot.lane.b32.xlu0 %v447, 1
    %v530 = vpop.permute.xlu0 %529
    %v531 = vsel %vm141, %v528, %v530
    %v532 = vsel %vm141, %v526, %v528
    %v533 = vsel %vm141, %v524, %v526
    %v534 = vsel %vm141, %v530, %v524
    %v535 = vld [vmem:[#allocation6 + $0x60] sm:$0xff]
    %v536 = vld [vmem:[#allocation6 + $0x68] sm:$0xff]
    %v537 = vld [vmem:[#allocation6 + $0x70] sm:$0xff]
    %v538 = vld [vmem:[#allocation6 + $0x78] sm:$0xff]
    %v539 = vmul.f32 %v534, %v535
    %v540 = vmul.f32 %v533, %v536
    %v541 = vmul.f32 %v532, %v537
    %v542 = vmul.f32 %v531, %v538
    %543 = vst [vmem:[#allocation2 + $0x60] sm:$0xff] %v539
    %544 = vst [vmem:[#allocation2 + $0x68] sm:$0xff] %v540
    %545 = vst [vmem:[#allocation2 + $0x70] sm:$0xff] %v541
    %546 = vst [vmem:[#allocation2 + $0x78] sm:$0xff] %v542
    %547 = vst [vmem:[#allocation2 + $0x80] sm:$0xff] %v374
    %548 = vst [vmem:[#allocation2 + $0x88] sm:$0xff] %v376
    %549 = vst [vmem:[#allocation2 + $0x90] sm:$0xff] %v445
    %550 = vst [vmem:[#allocation2 + $0x98] sm:$0xff] %v447
    %551 = vrot.lane.b32.xlu0 %v374, 127
    %v552 = vpop.permute.xlu0 %551
    %553 = vrot.lane.b32.xlu0 %v376, 127
    %v554 = vpop.permute.xlu0 %553
    %555 = vrot.lane.b32.xlu0 %v445, 127
    %v556 = vpop.permute.xlu0 %555
    %557 = vrot.lane.b32.xlu0 %v447, 127
    %v558 = vpop.permute.xlu0 %557
    %v559 = vsel %vm170, %v556, %v558
    %v560 = vsel %vm170, %v554, %v556
    %v561 = vsel %vm170, %v552, %v554
    %v562 = vsel %vm170, %v558, %v552
    %v563 = vld [vmem:[#allocation6 + $0xa0] sm:$0xff]
    %v564 = vld [vmem:[#allocation6 + $0xa8] sm:$0xff]
    %v565 = vld [vmem:[#allocation6 + $0xb0] sm:$0xff]
    %v566 = vld [vmem:[#allocation6 + $0xb8] sm:$0xff]
    %v567 = vmul.f32 %v561, %v563
    %v568 = vmul.f32 %v560, %v564
    %v569 = vmul.f32 %v559, %v565
    %v570 = vmul.f32 %v562, %v566
    %571 = vst [vmem:[#allocation2 + $0xa0] sm:$0xff] %v567
    %572 = vst [vmem:[#allocation2 + $0xa8] sm:$0xff] %v568
    %573 = vst [vmem:[#allocation2 + $0xb0] sm:$0xff] %v569
    %574 = vst [vmem:[#allocation2 + $0xb8] sm:$0xff] %v570
    %575 = vrot.lane.b32.xlu0 %v374, 113
    %v576 = vpop.permute.xlu0 %575
    %577 = vrot.lane.b32.xlu0 %v376, 113
    %v578 = vpop.permute.xlu0 %577
    %579 = vrot.lane.b32.xlu0 %v445, 113
    %v580 = vpop.permute.xlu0 %579
    %581 = vrot.lane.b32.xlu0 %v447, 113
    %v582 = vpop.permute.xlu0 %581
    %v583 = vsel %vm195, %v580, %v582
    %v584 = vsel %vm195, %v578, %v580
    %v585 = vsel %vm195, %v576, %v578
    %v586 = vsel %vm195, %v582, %v576
    %v587 = vld [vmem:[#allocation6 + $0xc0] sm:$0xff]
    %v588 = vld [vmem:[#allocation6 + $0xc8] sm:$0xff]
    %v589 = vld [vmem:[#allocation6 + $0xd0] sm:$0xff]
    %v590 = vld [vmem:[#allocation6 + $0xd8] sm:$0xff]
    %v591 = vmul.f32 %v585, %v587
    %v592 = vmul.f32 %v584, %v588
    %v593 = vmul.f32 %v583, %v589
    %v594 = vmul.f32 %v586, %v590
    %595 = vst [vmem:[#allocation2 + $0xc0] sm:$0xff] %v591
    %596 = vst [vmem:[#allocation2 + $0xc8] sm:$0xff] %v592
    %597 = vst [vmem:[#allocation2 + $0xd0] sm:$0xff] %v593
    %598 = vst [vmem:[#allocation2 + $0xd8] sm:$0xff] %v594
    %599 = vrot.lane.b32.xlu0 %v374, 112
    %v600 = vpop.permute.xlu0 %599
    %601 = vrot.lane.b32.xlu0 %v376, 112
    %v602 = vpop.permute.xlu0 %601
    %603 = vrot.lane.b32.xlu0 %v445, 112
    %v604 = vpop.permute.xlu0 %603
    %605 = vrot.lane.b32.xlu0 %v447, 112
    %v606 = vpop.permute.xlu0 %605
    %v607 = vsel %vm220, %v604, %v606
    %v608 = vsel %vm220, %v602, %v604
    %v609 = vsel %vm220, %v600, %v602
    %v610 = vsel %vm220, %v606, %v600
    %v611 = vld [vmem:[#allocation6 + $0xe0] sm:$0xff]
    %v612 = vld [vmem:[#allocation6 + $0xe8] sm:$0xff]
    %v613 = vld [vmem:[#allocation6 + $0xf0] sm:$0xff]
    %v614 = vld [vmem:[#allocation6 + $0xf8] sm:$0xff]
    %v615 = vmul.f32 %v609, %v611
    %v616 = vmul.f32 %v608, %v612
    %v617 = vmul.f32 %v607, %v613
    %v618 = vmul.f32 %v610, %v614
    %619 = vst [vmem:[#allocation2 + $0xe0] sm:$0xff] %v615
    %620 = vst [vmem:[#allocation2 + $0xe8] sm:$0xff] %v616
    %621 = vst [vmem:[#allocation2 + $0xf0] sm:$0xff] %v617
    %622 = vst [vmem:[#allocation2 + $0xf8] sm:$0xff] %v618
    %623 = vrot.lane.b32.xlu0 %v374, 111
    %v624 = vpop.permute.xlu0 %623
    %625 = vrot.lane.b32.xlu0 %v376, 111
    %v626 = vpop.permute.xlu0 %625
    %627 = vrot.lane.b32.xlu0 %v445, 111
    %v628 = vpop.permute.xlu0 %627
    %629 = vrot.lane.b32.xlu0 %v447, 111
    %v630 = vpop.permute.xlu0 %629
    %v631 = vsel %vm245, %v628, %v630
    %v632 = vsel %vm245, %v626, %v628
    %v633 = vsel %vm245, %v624, %v626
    %v634 = vsel %vm245, %v630, %v624
    %v635 = vld [vmem:[#allocation6 + $0x100] sm:$0xff]
    %v636 = vld [vmem:[#allocation6 + $0x108] sm:$0xff]
    %v637 = vld [vmem:[#allocation6 + $0x110] sm:$0xff]
    %v638 = vld [vmem:[#allocation6 + $0x118] sm:$0xff]
    %v639 = vmul.f32 %v633, %v635
    %v640 = vmul.f32 %v632, %v636
    %v641 = vmul.f32 %v631, %v637
    %v642 = vmul.f32 %v634, %v638
    %643 = vst [vmem:[#allocation2 + $0x100] sm:$0xff] %v639
    %644 = vst [vmem:[#allocation2 + $0x108] sm:$0xff] %v640
    %645 = vst [vmem:[#allocation2 + $0x110] sm:$0xff] %v641
    %646 = vst [vmem:[#allocation2 + $0x118] sm:$0xff] %v642
    %v647 = vld [vmem:[#allocation2] sm:$0xff]
    %v648 = vld [vmem:[#allocation2 + $0x8] sm:$0xff]
    %v649 = vld [vmem:[#allocation2 + $0x10] sm:$0xff]
    %v650 = vld [vmem:[#allocation2 + $0x18] sm:$0xff]
    %v651 = vld [vmem:[#allocation2 + $0x20] sm:$0xff]
    %v652 = vld [vmem:[#allocation2 + $0x28] sm:$0xff]
    %v653 = vld [vmem:[#allocation2 + $0x30] sm:$0xff]
    %v654 = vld [vmem:[#allocation2 + $0x38] sm:$0xff]
    %v655 = vld [vmem:[#allocation2 + $0x40] sm:$0xff]
    %v656 = vld [vmem:[#allocation2 + $0x48] sm:$0xff]
    %v657 = vld [vmem:[#allocation2 + $0x50] sm:$0xff]
    %v658 = vld [vmem:[#allocation2 + $0x58] sm:$0xff]
    %v659 = vld [vmem:[#allocation2 + $0x60] sm:$0xff]
    %v660 = vld [vmem:[#allocation2 + $0x68] sm:$0xff]
    %v661 = vld [vmem:[#allocation2 + $0x70] sm:$0xff]
    %v662 = vld [vmem:[#allocation2 + $0x78] sm:$0xff]
    %v663 = vld [vmem:[#allocation2 + $0x80] sm:$0xff]
    %v664 = vld [vmem:[#allocation2 + $0x88] sm:$0xff]
    %v665 = vld [vmem:[#allocation2 + $0x90] sm:$0xff]
    %v666 = vld [vmem:[#allocation2 + $0x98] sm:$0xff]
    %v667 = vld [vmem:[#allocation2 + $0xa0] sm:$0xff]
    %v668 = vld [vmem:[#allocation2 + $0xa8] sm:$0xff]
    %v669 = vld [vmem:[#allocation2 + $0xb0] sm:$0xff]
    %v670 = vld [vmem:[#allocation2 + $0xb8] sm:$0xff]
    %v671 = vld [vmem:[#allocation2 + $0xc0] sm:$0xff]
    %v672 = vld [vmem:[#allocation2 + $0xc8] sm:$0xff]
    %v673 = vld [vmem:[#allocation2 + $0xd0] sm:$0xff]
    %v674 = vld [vmem:[#allocation2 + $0xd8] sm:$0xff]
    %v675 = vld [vmem:[#allocation2 + $0xe0] sm:$0xff]
    %v676 = vld [vmem:[#allocation2 + $0xe8] sm:$0xff]
    %v677 = vld [vmem:[#allocation2 + $0xf0] sm:$0xff]
    %v678 = vld [vmem:[#allocation2 + $0xf8] sm:$0xff]
    %v679 = vld [vmem:[#allocation2 + $0x100] sm:$0xff]
    %v680 = vld [vmem:[#allocation2 + $0x108] sm:$0xff]
    %v681 = vld [vmem:[#allocation2 + $0x110] sm:$0xff]
    %v682 = vld [vmem:[#allocation2 + $0x118] sm:$0xff]
    %684 = vset.pattern.permute.xlu0 0
    %685 = vperm.xlu0 %684, %v450
    %v686 = vpop.permute.xlu0 %685
    %v689 = vsel %vm303, %v449, 0
    %691 = vmatprep.subr.mxu0 0.0
    %692 = vmatpush1.msra.mxu0 0.0
    %693 = vmatprep.subr.mxu0 0.0
    %694 = vmatpush1.msra.mxu0 0.0
    %695 = vmatprep.subr.mxu0 0.0
    %696 = vmatpush1.msra.mxu0 0.0
    %697 = vmatprep.subr.mxu0 0.0
    %698 = vmatpush1.msra.mxu0 0.0
    %699 = vmatprep.subr.mxu0 0.0
    %700 = vmatpush1.msra.mxu0 0.0
    %701 = vmatprep.subr.mxu0 0.0
    %702 = vmatpush1.msra.mxu0 0.0
    %703 = vmatprep.subr.mxu0 0.0
    %704 = vmatpush1.msra.mxu0 0.0
    %705 = vmatprep.subr.mxu0 %v680
    %706 = vmatpush1.msra.mxu0 %v679
    %707 = vmatprep.subr.mxu0 %v676
    %708 = vmatpush1.msra.mxu0 %v675
    %709 = vmatprep.subr.mxu0 %v672
    %710 = vmatpush1.msra.mxu0 %v671
    %711 = vmatprep.subr.mxu0 %v668
    %712 = vmatpush1.msra.mxu0 %v667
    %713 = vmatprep.subr.mxu0 %v664
    %714 = vmatpush1.msra.mxu0 %v663
    %715 = vmatprep.subr.mxu0 %v660
    %716 = vmatpush1.msra.mxu0 %v659
    %717 = vmatprep.subr.mxu0 %v656
    %718 = vmatpush1.msra.mxu0 %v655
    %719 = vmatprep.subr.mxu0 %v652
    %720 = vmatpush1.msra.mxu0 %v651
    %721 = vmatprep.subr.mxu0 %v648
    %722 = vmatpush1.msra.mxu0 %v647
    %723 = vmatprep.subr.mxu0 0.0
    %724 = vmatpush2.msra.mxu0 0.0
    %725 = vmatprep.subr.mxu0 0.0
    %726 = vmatpush2.msra.mxu0 0.0
    %727 = vmatprep.subr.mxu0 0.0
    %728 = vmatpush2.msra.mxu0 0.0
    %729 = vmatprep.subr.mxu0 0.0
    %730 = vmatpush2.msra.mxu0 0.0
    %731 = vmatprep.subr.mxu0 0.0
    %732 = vmatpush2.msra.mxu0 0.0
    %733 = vmatprep.subr.mxu0 0.0
    %734 = vmatpush2.msra.mxu0 0.0
    %735 = vmatprep.subr.mxu0 0.0
    %736 = vmatpush2.msra.mxu0 0.0
    %737 = vmatprep.subr.mxu0 0.0
    %738 = vmatpush2.msra.mxu0 0.0
    %739 = vmatprep.subr.mxu0 0.0
    %740 = vmatpush2.msra.mxu0 0.0
    %741 = vmatprep.subr.mxu0 0.0
    %742 = vmatpush2.msra.mxu0 0.0
    %743 = vmatprep.subr.mxu0 0.0
    %744 = vmatpush2.msra.mxu0 0.0
    %745 = vmatprep.subr.mxu0 0.0
    %746 = vmatpush2.msra.mxu0 0.0
    %747 = vmatprep.subr.mxu0 0.0
    %748 = vmatpush2.msra.mxu0 0.0
    %749 = vmatprep.subr.mxu0 0.0
    %750 = vmatpush2.msra.mxu0 0.0
    %751 = vmatprep.subr.mxu0 0.0
    %752 = vmatpush2.msra.mxu0 0.0
    %753 = vmatprep.subr.mxu0 0.0
    %754 = vmatpush2.msra.mxu0 0.0
    %755 = vmatprep.mubr.f32.mxu0 0.0
    %756 = vmatmul.mubr.f32.gmra.mxu0 %v689
    %v757 = vpop.f32.mrf.mxu0
    %v758 = vadd.f32 %v686, %v757
    %v759 = vpop.f32.mrf.mxu0
    %v760 = vadd.f32 %v686, %v759
    %761 = vdwg.mxu0
    %762 = vmatprep.subr.mxu0 0.0
    %763 = vmatpush1.msra.mxu0 0.0
    %764 = vmatprep.subr.mxu0 0.0
    %765 = vmatpush1.msra.mxu0 0.0
    %766 = vmatprep.subr.mxu0 0.0
    %767 = vmatpush1.msra.mxu0 0.0
    %768 = vmatprep.subr.mxu0 0.0
    %769 = vmatpush1.msra.mxu0 0.0
    %770 = vmatprep.subr.mxu0 0.0
    %771 = vmatpush1.msra.mxu0 0.0
    %772 = vmatprep.subr.mxu0 0.0
    %773 = vmatpush1.msra.mxu0 0.0
    %774 = vmatprep.subr.mxu0 0.0
    %775 = vmatpush1.msra.mxu0 0.0
    %776 = vmatprep.subr.mxu0 %v682
    %777 = vmatpush1.msra.mxu0 %v681
    %778 = vmatprep.subr.mxu0 %v678
    %779 = vmatpush1.msra.mxu0 %v677
    %780 = vmatprep.subr.mxu0 %v674
    %781 = vmatpush1.msra.mxu0 %v673
    %782 = vmatprep.subr.mxu0 %v670
    %783 = vmatpush1.msra.mxu0 %v669
    %784 = vmatprep.subr.mxu0 %v666
    %785 = vmatpush1.msra.mxu0 %v665
    %786 = vmatprep.subr.mxu0 %v662
    %787 = vmatpush1.msra.mxu0 %v661
    %788 = vmatprep.subr.mxu0 %v658
    %789 = vmatpush1.msra.mxu0 %v657
    %790 = vmatprep.subr.mxu0 %v654
    %791 = vmatpush1.msra.mxu0 %v653
    %792 = vmatprep.subr.mxu0 %v650
    %793 = vmatpush1.msra.mxu0 %v649
    %794 = vmatprep.subr.mxu0 0.0
    %795 = vmatpush2.msra.mxu0 0.0
    %796 = vmatprep.subr.mxu0 0.0
    %797 = vmatpush2.msra.mxu0 0.0
    %798 = vmatprep.subr.mxu0 0.0
    %799 = vmatpush2.msra.mxu0 0.0
    %800 = vmatprep.subr.mxu0 0.0
    %801 = vmatpush2.msra.mxu0 0.0
    %802 = vmatprep.subr.mxu0 0.0
    %803 = vmatpush2.msra.mxu0 0.0
    %804 = vmatprep.subr.mxu0 0.0
    %805 = vmatpush2.msra.mxu0 0.0
    %806 = vmatprep.subr.mxu0 0.0
    %807 = vmatpush2.msra.mxu0 0.0
    %808 = vmatprep.subr.mxu0 0.0
    %809 = vmatpush2.msra.mxu0 0.0
    %810 = vmatprep.subr.mxu0 0.0
    %811 = vmatpush2.msra.mxu0 0.0
    %812 = vmatprep.subr.mxu0 0.0
    %813 = vmatpush2.msra.mxu0 0.0
    %814 = vmatprep.subr.mxu0 0.0
    %815 = vmatpush2.msra.mxu0 0.0
    %816 = vmatprep.subr.mxu0 0.0
    %817 = vmatpush2.msra.mxu0 0.0
    %818 = vmatprep.subr.mxu0 0.0
    %819 = vmatpush2.msra.mxu0 0.0
    %820 = vmatprep.subr.mxu0 0.0
    %821 = vmatpush2.msra.mxu0 0.0
    %822 = vmatprep.subr.mxu0 0.0
    %823 = vmatpush2.msra.mxu0 0.0
    %824 = vmatprep.subr.mxu0 0.0
    %825 = vmatpush2.msra.mxu0 0.0
    %826 = vmatprep.mubr.f32.mxu0 0.0
    %827 = vmatmul.mubr.f32.gmra.mxu0 %v689
    %v828 = vpop.f32.mrf.mxu0
    %v829 = vadd.f32 %v686, %v828
    %v830 = vpop.f32.mrf.mxu0
    %v831 = vadd.f32 %v686, %v830
    %832 = vdwg.mxu0
    %v833 = vmax.f32 %v758, 0.0
    %v834 = vmax.f32 %v760, 0.0
    %v835 = vmax.f32 %v829, 0.0
    %v836 = vmax.f32 %v831, 0.0
    %837 = vst [vmem:[#allocation8] sm:$0xff] %v833
    %838 = vst [vmem:[#allocation8 + $0x8] sm:$0xff] %v834
    %839 = vst [vmem:[#allocation8 + $0x10] sm:$0xff] %v835
    %840 = vst [vmem:[#allocation8 + $0x18] sm:$0xff] %v836
    // Predicated region
    $region34: #{tpu_custom_call.1} parent=1 // pred_check
      _
    $region35: #{tpu_custom_call.1} parent=1 // pred_check_branch
      %842 = sbr.rel (0) target = $region37
    $region36: #{tpu_custom_call.1} parent=1 // pred_region
      %s844 = ssub.s32 512, 512
      %845 = vsyncadd [#allocation5], %s844
      %s847 = sshll.u32 [#allocation8], 4
      %s848 = int_to_ptr.vmem [resolvable:$true] %s847
      %850 = dma.vmem_to_hbm [thread:$0]  %s848, 512, %s6, [#allocation5]
    $region37: #{tpu_custom_call.1} parent=1 // pred_fallthru
      _
    // Predicated region
    $region38: #{tpu_custom_call.1} parent=1 // pred_check
      _
    $region39: #{tpu_custom_call.1} parent=1 // pred_check_branch
      %852 = sbr.rel (0) target = $region41
    $region40: #{tpu_custom_call.1} parent=1 // pred_region
      %853 = dma.done [#allocation5], 512
    $region41: #{tpu_custom_call.1} parent=1 // pred_fallthru
      _
    %854 = vsyncpa [#allocation4], 1
    %855 = vsyncpa [#allocation7], 1
    %856 = vsyncpa [#allocation5], 1

</llo_original>
